<compile_context>
chip_gen: v7x
topology: tpu7x:2x2x1
jax: 0.10.0
libtpu: 0.0.40
codegen_flags: <defaults>
</compile_context>

<pallas_src>
import jax
import jax.numpy as jnp
import numpy as np
from jax.experimental import pallas as pl
from jax.experimental.pallas import tpu as pltpu


def cnn_kernel(x_ref, w_ref, b_ref, o_ref):
    """Fused Conv1d + ReLU + global max-pool for one batch tile.

    x_ref: (TB, M, C)    input tile, channels-last (C on the lane axis)
    w_ref: (K*C, O_pad)  conv weight, row index = k*C + c
    b_ref: (1, O_pad)    conv bias (zeros in padded lanes)
    o_ref: (TB, O_pad)   pooled output tile (lane-dense)
    """
    TB, M, C = x_ref.shape
    KC, O_pad = w_ref.shape
    K = KC // C
    L = M - K + 1                                   # valid-conv output length

    x = x_ref[...]                                  # native dtype straight to the MXU
    # im2col: K shifted views concatenated on the lane axis -> (TB, L, K*C).
    cols = jnp.concatenate([x[:, k:k + L, :] for k in range(K)], axis=-1)
    # One MXU contraction over the fused (K, C) axis, f32 accumulation.
    conv = jnp.dot(cols.reshape(TB * L, KC), w_ref[...],
                   preferred_element_type=jnp.float32)        # (TB*L, O_pad) f32
    # Max over time first, then bias + ReLU (exactly equal to relu(conv+b) then max,
    # since bias is per-channel and ReLU is monotone) -> no VPU work on (TB, L, O).
    pooled = jnp.max(conv.reshape(TB, L, O_pad), axis=1)      # (TB, O_pad) f32
    out = jnp.maximum(pooled + b_ref[...].astype(jnp.float32), 0.0)
    o_ref[...] = out.astype(o_ref.dtype)


def cnn_forward(x, weight, bias, *, block_b=64, channels_last=False):
    """Forward of CNN: relu(conv1d(x)) -> adaptive_max_pool1d(1) -> squeeze(dim=2).

    x:      (B, C, M) PyTorch NCW layout, or (B, M, C) when channels_last=True
    weight: (O, C, K) PyTorch Conv1d weight
    bias:   (O,)
    returns (B, O)
    """
    if channels_last:
        B, M, C = x.shape
        x_bmc = x
    else:
        B, C, M = x.shape
        # One-time relayout so channels sit on the lane axis.  Producers that can
        # emit channels-last should pass channels_last=True and skip this HBM pass.
        x_bmc = jnp.transpose(x, (0, 2, 1))
    O, _, K = weight.shape
    L = M - K + 1
    assert L >= 1, "m_word must be >= kernel size (Conv1d has no padding here)"

    # Lane-dense output: pad the channel dim to a multiple of 128 (weight/bias only;
    # both are tiny).  Production e_word that is already a multiple of 128 pads to itself.
    O_pad = max(128, ((O + 127) // 128) * 128)
    w_kc_o = jnp.transpose(weight, (2, 1, 0)).reshape(K * C, O)   # row = k*C + c
    w_kc_o = jnp.pad(w_kc_o, ((0, 0), (0, O_pad - O)))
    b_row = jnp.pad(bias, (0, O_pad - O)).reshape(1, O_pad)

    # Batch tile: TB == B (single block) or a multiple of 8 so the 2-D output block
    # satisfies the (8, 128) tiling rule.
    TB = min(block_b, B)
    if TB < B:
        TB = max(8, (TB // 8) * 8)
    grid = (pl.cdiv(B, TB),)

    itemsize = jnp.dtype(x.dtype).itemsize
    cost = pl.CostEstimate(
        flops=2 * B * L * K * C * O_pad,
        transcendentals=0,
        bytes_accessed=B * M * C * itemsize + K * C * O_pad * itemsize
        + B * O_pad * itemsize,
    )

    out = pl.pallas_call(
        cnn_kernel,
        out_shape=jax.ShapeDtypeStruct((B, O_pad), x.dtype),
        grid=grid,
        in_specs=[
            pl.BlockSpec((TB, M, C), lambda i: (i, 0, 0)),        # batch-tiled x
            pl.BlockSpec((K * C, O_pad), lambda i: (0, 0)),       # resident weight
            pl.BlockSpec((1, O_pad), lambda i: (0, 0)),           # resident bias
        ],
        out_specs=pl.BlockSpec((TB, O_pad), lambda i: (i, 0)),
        compiler_params=pltpu.CompilerParams(
            dimension_semantics=("parallel",)),                   # megacore on v7x
        cost_estimate=cost,
    )(x_bmc, w_kc_o, b_row)
    return out[:, :O]


def cnn_reference(x_ncw, weight_ock, bias_o):
    """Pure-JAX reference of F.relu(conv1d(x)) -> adaptive_max_pool1d(1) -> squeeze."""
    O, C, K = weight_ock.shape
    M = x_ncw.shape[2]
    L = M - K + 1
    taps = jnp.stack([x_ncw[:, :, k:k + L] for k in range(K)], axis=-1)  # (B,C,L,K)
    conv = jnp.einsum("bclk,ock->bol", taps, weight_ock) + bias_o[None, :, None]
    conv = jnp.maximum(conv, 0.0)
    return jnp.max(conv, axis=2)  # (B, O)


if __name__ == "__main__":
    # Small shapes consistent with the module: (batch, e_char, m_word) -> (batch, e_word)
    B, C, M = 32, 8, 16          # batch, input channels (e_char), word length
    O, K = 8, 5                  # output channels (e_word), kernel size

    key = jax.random.PRNGKey(0)
    kx, kw, kb = jax.random.split(key, 3)

    x = jax.random.normal(kx, (B, C, M), dtype=jnp.float32)

    # Deterministic Conv1d-style init: U(-bound, bound), bound = 1/sqrt(C*K)
    bound = 1.0 / np.sqrt(C * K)
    weight = jax.random.uniform(kw, (O, C, K), dtype=jnp.float32,
                                minval=-bound, maxval=bound)
    bias = jax.random.uniform(kb, (O,), dtype=jnp.float32,
                              minval=-bound, maxval=bound)

    fwd = jax.jit(cnn_forward, static_argnames=("block_b", "channels_last"))
    out = fwd(x, weight, bias, block_b=16)   # 2 batch tiles -> exercises the grid
    out = jax.block_until_ready(out)

    ref = cnn_reference(x, weight, bias)
    assert out.shape == (B, O)
    np.testing.assert_allclose(np.asarray(out), np.asarray(ref),
                               rtol=1e-5, atol=1e-5)
    print("KERNEL_OK")
</pallas_src>

<mosaic_0001>
module attributes {stable_mosaic.version = 11 : i64} {
  func.func @cnn_kernel(%arg0: i32, %arg1: memref<16x16x8xf32, #tpu.memory_space<vmem>>, %arg2: memref<40x128xf32, #tpu.memory_space<vmem>>, %arg3: memref<1x128xf32, #tpu.memory_space<vmem>>, %arg4: memref<16x128xf32, #tpu.memory_space<vmem>>) attributes {dimension_semantics = [#tpu.dimension_semantics<parallel>], iteration_bounds = array<i64: 2>, scalar_prefetch = 0 : i64, scratch_operands = 0 : i64, tpu.core_type = #tpu.core_type<tc>, window_params = [{transform_indices = @transform_0, window_bounds = array<i64: 16, 16, 8>}, {pipeline_mode = #tpu.pipeline_mode<synchronous>, transform_indices = @transform_1, window_bounds = array<i64: 40, 128>}, {pipeline_mode = #tpu.pipeline_mode<synchronous>, transform_indices = @transform_2, window_bounds = array<i64: 1, 128>}, {transform_indices = @transform_3, window_bounds = array<i64: 16, 128>}]} {
    %c0 = arith.constant 0 : index
    %c0_0 = arith.constant 0 : index
    %c0_1 = arith.constant 0 : index
    %0 = vector.load %arg1[%c0, %c0_0, %c0_1] : memref<16x16x8xf32, #tpu.memory_space<vmem>>, vector<16x16x8xf32>
    %1 = vector.extract_strided_slice %0 {offsets = [0, 0, 0], sizes = [16, 12, 8], strides = [1, 1, 1]} : vector<16x16x8xf32> to vector<16x12x8xf32>
    %2 = vector.extract_strided_slice %0 {offsets = [0, 1, 0], sizes = [16, 12, 8], strides = [1, 1, 1]} : vector<16x16x8xf32> to vector<16x12x8xf32>
    %3 = vector.extract_strided_slice %0 {offsets = [0, 2, 0], sizes = [16, 12, 8], strides = [1, 1, 1]} : vector<16x16x8xf32> to vector<16x12x8xf32>
    %4 = vector.extract_strided_slice %0 {offsets = [0, 3, 0], sizes = [16, 12, 8], strides = [1, 1, 1]} : vector<16x16x8xf32> to vector<16x12x8xf32>
    %5 = vector.extract_strided_slice %0 {offsets = [0, 4, 0], sizes = [16, 12, 8], strides = [1, 1, 1]} : vector<16x16x8xf32> to vector<16x12x8xf32>
    %6 = tpu.concatenate %1, %2, %3, %4, %5 in 2 : vector<16x12x8xf32>, vector<16x12x8xf32>, vector<16x12x8xf32>, vector<16x12x8xf32>, vector<16x12x8xf32> -> vector<16x12x40xf32>
    %7 = vector.shape_cast %6 : vector<16x12x40xf32> to vector<192x40xf32>
    %c0_2 = arith.constant 0 : index
    %c0_3 = arith.constant 0 : index
    %8 = vector.load %arg2[%c0_2, %c0_3] : memref<40x128xf32, #tpu.memory_space<vmem>>, vector<40x128xf32>
    %cst = arith.constant dense<0.000000e+00> : vector<192x128xf32>
    %9 = tpu.matmul %7, %8, %cst {dimension_numbers = #tpu.dot_dimension_numbers<[1], [0], [0], [1], [0, 0, 1, 1], [], []>} : vector<192x40xf32>, vector<40x128xf32>, vector<192x128xf32> -> vector<192x128xf32>
    %10 = vector.shape_cast %9 : vector<192x128xf32> to vector<16x12x128xf32>
    %cst_4 = arith.constant dense<0xFF800000> : vector<16x128xf32>
    %11 = vector.multi_reduction <maximumf>, %10, %cst_4 [1] : vector<16x12x128xf32> to vector<16x128xf32>
    %c0_5 = arith.constant 0 : index
    %c0_6 = arith.constant 0 : index
    %12 = vector.load %arg3[%c0_5, %c0_6] : memref<1x128xf32, #tpu.memory_space<vmem>>, vector<1x128xf32>
    %13 = vector.broadcast %12 : vector<1x128xf32> to vector<16x128xf32>
    %14 = arith.addf %11, %13 : vector<16x128xf32>
    %cst_7 = arith.constant 0.000000e+00 : f32
    %15 = vector.broadcast %cst_7 : f32 to vector<16x128xf32>
    %16 = arith.maximumf %14, %15 : vector<16x128xf32>
    %c0_8 = arith.constant 0 : index
    %c0_9 = arith.constant 0 : index
    %17 = vector.load %arg4[%c0_8, %c0_9] : memref<16x128xf32, #tpu.memory_space<vmem>>, vector<16x128xf32>
    tpu.vector_store %arg4[%c0_8, %c0_9], %16 {strides = array<i32>} : memref<16x128xf32, #tpu.memory_space<vmem>>, vector<16x128xf32>,
    return
  }
  func.func @transform_0(%arg0: i32) -> (i32, i32, i32) {
    %c0_i32 = arith.constant 0 : i32
    %c0_i32_0 = arith.constant 0 : i32
    %c0_i32_1 = arith.constant 0 : i32
    return %arg0, %c0_i32, %c0_i32_0 : i32, i32, i32
  }
  func.func @transform_1(%arg0: i32) -> (i32, i32) {
    %c0_i32 = arith.constant 0 : i32
    %c0_i32_0 = arith.constant 0 : i32
    %c0_i32_1 = arith.constant 0 : i32
    return %c0_i32, %c0_i32_0 : i32, i32
  }
  func.func @transform_2(%arg0: i32) -> (i32, i32) {
    %c0_i32 = arith.constant 0 : i32
    %c0_i32_0 = arith.constant 0 : i32
    %c0_i32_1 = arith.constant 0 : i32
    return %c0_i32, %c0_i32_0 : i32, i32
  }
  func.func @transform_3(%arg0: i32) -> (i32, i32) {
    %c0_i32 = arith.constant 0 : i32
    %c0_i32_0 = arith.constant 0 : i32
    return %arg0, %c0_i32 : i32, i32
  }
}

</mosaic_0001>

<llo_original>
// kernel: cnn_forward.1
$region0: #{cnn_forward.1}
  #allocation0 [shape = 'u32[]', space=smem, size = 0x4, offset = 0x4, fixed_abs, tag = 'smem constant byte address 0x4 - core index']
  #allocation1 [shape = 'u32[144,128]{1,0:T(1,128)}', space=vmem, size = 0x12000, scoped, tag = 'internal scratch']
  %s0 = inlined_call_operand.vmem [shape: f32[32,16,8], index: 0, kind: input, shape index: {}]
  %s1 = inlined_call_operand.vmem [shape: f32[40,128], index: 1, kind: input, shape index: {}]
  %s2 = inlined_call_operand.vmem [shape: f32[1,128], index: 2, kind: input, shape index: {}]
  %s3 = inlined_call_operand.vmem [shape: f32[32,128], index: 3, kind: output, shape index: {}]
  %s4 = sld [smem:[#allocation0]]
  $region45: #{cnn_forward.1} parent=0
    _
  %s6 = ssub.s32 1, %s4
  %s7 = scalar_select 0, %s6, %s4
  loop: start=0, step=1, limit=4
  $region2: #{cnn_forward.1} parent=0 // loop_pre_header
    _
  $region3: #{cnn_forward.1} parent=0 // loop_header
    %s9 = sphi 0, %s13
    %p10 = scmp.ge.s32.totalorder %s9, 4
    %s19 = sphi 0, %s21
    %s22 = sphi 0, %s19
    %s23 = sphi 0, %s22
    %s39 = sphi 0, %s23
    %s43 = sphi 0, %s43
    %s45 = sphi 0, %s43
    %s46 = sphi 0, %s45
    %s60 = sphi 0, %s46
    %s64 = sphi 0, %s64
    %s66 = sphi 0, %s64
    %s67 = sphi 0, %s66
    %s81 = sphi 0, %s67
    %s87 = sphi 0, %s89
    %s90 = sphi 0, %s87
    %s91 = sphi 0, %s90
    %s107 = sphi 0, %s91
  $region4: #{cnn_forward.1} parent=0 // loop_header_branch
    %12 = sbr.rel (%p10) target = $region8
  $region5: #{cnn_forward.1} parent=0 // loop_body
    %s14 = ssub.s32 %s9, 1
    %s15 = ssub.s32 %s9, 2
    %s16 = sadd.s32 %s9, 1
    %s17 = ssub.s32 %s9, %s16
    %p18 = scmp.eq.s32.totalorder %s17, 0
    %s20 = sadd.s32 %s19, 1
    %s21 = scalar_select %p18, %s19, %s20
    %p24 = pneg %p18
    %p25 = scmp.eq.s32.totalorder %s9, 1
    %p26 = por %p24, %p25
    %p27 = scmp.ne.s32.totalorder %s19, %s22
    %p28 = scmp.eq.s32.totalorder %s9, 0
    %p29 = por %p27, %p28
    %p30 = scmp.ne.s32.totalorder %s19, %s22
    %p31 = scmp.eq.s32.totalorder %s14, 1
    %p32 = por %p30, %p31
    %p33 = scmp.ne.s32.totalorder %s22, %s23
    %p34 = scmp.eq.s32.totalorder %s14, 0
    %p35 = por %p33, %p34
    %p36 = scmp.ne.s32.totalorder %s22, %s23
    %p37 = scmp.eq.s32.totalorder %s15, 1
    %p38 = por %p36, %p37
    %p40 = scmp.ne.s32.totalorder %s23, %s39
    %p41 = scmp.eq.s32.totalorder %s15, 0
    %p42 = por %p40, %p41
    %s44 = sadd.s32 %s43, 1
    %p47 = scmp.eq.s32.totalorder %s9, 1
    %p48 = scmp.ne.s32.totalorder %s43, %s45
    %p49 = scmp.eq.s32.totalorder %s9, 0
    %p50 = por %p48, %p49
    %p51 = scmp.ne.s32.totalorder %s43, %s45
    %p52 = scmp.eq.s32.totalorder %s14, 1
    %p53 = por %p51, %p52
    %p54 = scmp.ne.s32.totalorder %s45, %s46
    %p55 = scmp.eq.s32.totalorder %s14, 0
    %p56 = por %p54, %p55
    %p57 = scmp.ne.s32.totalorder %s45, %s46
    %p58 = scmp.eq.s32.totalorder %s15, 1
    %p59 = por %p57, %p58
    %p61 = scmp.ne.s32.totalorder %s46, %s60
    %p62 = scmp.eq.s32.totalorder %s15, 0
    %p63 = por %p61, %p62
    %s65 = sadd.s32 %s64, 1
    %p68 = scmp.eq.s32.totalorder %s9, 1
    %p69 = scmp.ne.s32.totalorder %s64, %s66
    %p70 = scmp.eq.s32.totalorder %s9, 0
    %p71 = por %p69, %p70
    %p72 = scmp.ne.s32.totalorder %s64, %s66
    %p73 = scmp.eq.s32.totalorder %s14, 1
    %p74 = por %p72, %p73
    %p75 = scmp.ne.s32.totalorder %s66, %s67
    %p76 = scmp.eq.s32.totalorder %s14, 0
    %p77 = por %p75, %p76
    %p78 = scmp.ne.s32.totalorder %s66, %s67
    %p79 = scmp.eq.s32.totalorder %s15, 1
    %p80 = por %p78, %p79
    %p82 = scmp.ne.s32.totalorder %s67, %s81
    %p83 = scmp.eq.s32.totalorder %s15, 0
    %p84 = por %p82, %p83
    %s85 = ssub.s32 %s9, %s16
    %p86 = scmp.eq.s32.totalorder %s85, 0
    %s88 = sadd.s32 %s87, 1
    %s89 = scalar_select %p86, %s87, %s88
    %p92 = pneg %p86
    %p93 = scmp.eq.s32.totalorder %s9, 1
    %p94 = por %p92, %p93
    %p95 = scmp.ne.s32.totalorder %s87, %s90
    %p96 = scmp.eq.s32.totalorder %s9, 0
    %p97 = por %p95, %p96
    %p98 = scmp.ne.s32.totalorder %s87, %s90
    %p99 = scmp.eq.s32.totalorder %s14, 1
    %p100 = por %p98, %p99
    %p101 = scmp.ne.s32.totalorder %s90, %s91
    %p102 = scmp.eq.s32.totalorder %s14, 0
    %p103 = por %p101, %p102
    %p104 = scmp.ne.s32.totalorder %s90, %s91
    %p105 = scmp.eq.s32.totalorder %s15, 1
    %p106 = por %p104, %p105
    %p108 = scmp.ne.s32.totalorder %s91, %s107
    %p109 = scmp.eq.s32.totalorder %s15, 0
    %p110 = por %p108, %p109
    %p111 = scmp.le.s32.totalorder 1, %s9
    %p112 = scmp.lt.s32.totalorder %s9, 3
    %p113 = pnand %p111, %p112
    %p114 = pneg %p113
    // Predicated region
    $region9: #{cnn_forward.1} parent=5 // pred_check
      _
    $region10: #{cnn_forward.1} parent=5 // pred_check_branch
      %116 = sbr.rel (%p113) target = $region12
    $region11: #{cnn_forward.1} parent=5 // pred_region
      %s117 = ssub.s32 %s9, 1
      // Predicated region
      $region13: #{cnn_forward.1} parent=11 // pred_check
        %p118 = pneg %p56
      $region14: #{cnn_forward.1} parent=11 // pred_check_branch
        %120 = sbr.rel (%p118) target = $region16
      $region15: #{cnn_forward.1} parent=11 // pred_region
        _
      $region16: #{cnn_forward.1} parent=11 // pred_fallthru
        _
      // Predicated region
      $region17: #{cnn_forward.1} parent=11 // pred_check
        %p121 = pneg %p77
      $region18: #{cnn_forward.1} parent=11 // pred_check_branch
        %123 = sbr.rel (%p121) target = $region20
      $region19: #{cnn_forward.1} parent=11 // pred_region
        _
      $region20: #{cnn_forward.1} parent=11 // pred_fallthru
        _
    $region12: #{cnn_forward.1} parent=5 // pred_fallthru
      _
    %p124 = scmp.lt.s32.totalorder %s9, 2
    // Predicated region
    $region21: #{cnn_forward.1} parent=5 // pred_check
      %p125 = pneg %p124
    $region22: #{cnn_forward.1} parent=5 // pred_check_branch
      %127 = sbr.rel (%p125) target = $region24
    $region23: #{cnn_forward.1} parent=5 // pred_region
      // Predicated region
      $region25: #{cnn_forward.1} parent=23 // pred_check
        %p128 = pneg %p29
      $region26: #{cnn_forward.1} parent=23 // pred_check_branch
        %130 = sbr.rel (%p128) target = $region28
      $region27: #{cnn_forward.1} parent=23 // pred_region
        %s131 = smul.u32 16, %s9
        %p132 = scmp.lt.s32.totalorder %s131, 31
        %s133 = scalar_select %p132, %s131, 31
        %s134 = smul.addr %s133, 2
        %s135 = smul.addr %s134, 8
        %s136 = scalar_lea.vmem %s0, %s135
        %s137 = smul.u32 16, %s9
      $region28: #{cnn_forward.1} parent=23 // pred_fallthru
        _
    $region24: #{cnn_forward.1} parent=5 // pred_fallthru
      _
    %p138 = scmp.le.s32.totalorder 1, %s9
    %p139 = scmp.lt.s32.totalorder %s9, 3
    %p140 = pnand %p138, %p139
    %p141 = pneg %p140
    // Predicated region
    $region29: #{cnn_forward.1} parent=5 // pred_check
      _
    $region30: #{cnn_forward.1} parent=5 // pred_check_branch
      %143 = sbr.rel (%p140) target = $region32
    $region31: #{cnn_forward.1} parent=5 // pred_region
      %s144 = ssub.s32 %s9, 1
      %s145 = smul.u32 16, %s14
      %p146 = scmp.lt.s32.totalorder %s145, 31
      %s147 = scalar_select %p146, %s145, 31
      %s148 = smul.addr %s147, 2
      %s149 = smul.addr %s148, 8
      %s150 = scalar_lea.vmem %s0, %s149
      %p151 = pneg %p35
      %p152 = pneg %p32
      %p153 = pneg %p56
      %p154 = pneg %p53
      %p155 = pneg %p77
      %p156 = pneg %p74
      %p157 = pneg %p103
      %p158 = pneg %p100
      %s159 = smul.u32 2, %s14
      %p160 = scmp.lt.s32.totalorder %s159, 3
      %s161 = scalar_select %p160, %s159, 3
      %s162 = smul.addr %s161, 8
      %s163 = scalar_lea.vmem %s3, %s162
      %s164 = smul.u32 16, %s14
      %p165 = scmp.lt.s32.totalorder %s164, 31
      %s166 = scalar_select %p165, %s164, 31
      %s167 = smul.addr %s166, 2
      %s168 = smul.addr %s167, 8
      %s169 = scalar_lea.vmem %s0, %s168
      %s170 = smul.u32 16, %s14
      %s171 = smul.u32 2, %s14
      %p172 = scmp.lt.s32.totalorder %s171, 3
      %s173 = scalar_select %p172, %s171, 3
      %s174 = smul.addr %s173, 8
      %s175 = scalar_lea.vmem %s3, %s174
      %s176 = smul.u32 2, %s14
      %v177 = vld [vmem:[%s169] sm:$0xff]
      %v178 = vld [vmem:[%s169 + $0x8] sm:$0xff]
      %v179 = vld [vmem:[%s169 + $0x10] sm:$0xff]
      %v180 = vld [vmem:[%s169 + $0x18] sm:$0xff]
      %v181 = vld [vmem:[%s169 + $0x20] sm:$0xff]
      %v182 = vld [vmem:[%s169 + $0x28] sm:$0xff]
      %v183 = vld [vmem:[%s169 + $0x30] sm:$0xff]
      %v184 = vld [vmem:[%s169 + $0x38] sm:$0xff]
      %v185 = vld [vmem:[%s169 + $0x40] sm:$0xff]
      %v186 = vld [vmem:[%s169 + $0x48] sm:$0xff]
      %v187 = vld [vmem:[%s169 + $0x50] sm:$0xff]
      %v188 = vld [vmem:[%s169 + $0x58] sm:$0xff]
      %v189 = vld [vmem:[%s169 + $0x60] sm:$0xff]
      %v190 = vld [vmem:[%s169 + $0x68] sm:$0xff]
      %v191 = vld [vmem:[%s169 + $0x70] sm:$0xff]
      %v192 = vld [vmem:[%s169 + $0x78] sm:$0xff]
      %v193 = vld [vmem:[%s169 + $0x80] sm:$0xff]
      %v194 = vld [vmem:[%s169 + $0x88] sm:$0xff]
      %v195 = vld [vmem:[%s169 + $0x90] sm:$0xff]
      %v196 = vld [vmem:[%s169 + $0x98] sm:$0xff]
      %v197 = vld [vmem:[%s169 + $0xa0] sm:$0xff]
      %v198 = vld [vmem:[%s169 + $0xa8] sm:$0xff]
      %v199 = vld [vmem:[%s169 + $0xb0] sm:$0xff]
      %v200 = vld [vmem:[%s169 + $0xb8] sm:$0xff]
      %v201 = vld [vmem:[%s169 + $0xc0] sm:$0xff]
      %v202 = vld [vmem:[%s169 + $0xc8] sm:$0xff]
      %v203 = vld [vmem:[%s169 + $0xd0] sm:$0xff]
      %v204 = vld [vmem:[%s169 + $0xd8] sm:$0xff]
      %v205 = vld [vmem:[%s169 + $0xe0] sm:$0xff]
      %v206 = vld [vmem:[%s169 + $0xe8] sm:$0xff]
      %v207 = vld [vmem:[%s169 + $0xf0] sm:$0xff]
      %v208 = vld [vmem:[%s169 + $0xf8] sm:$0xff]
      %vm241 = vcmask 1046528
      %v242 = vrot.slane %v177, 1
      %v243 = vrot.slane %v178, 1
      %v244 = vsel %vm241, %v242, %v243
      %v245 = vrot.slane %v179, 1
      %v246 = vrot.slane %v180, 1
      %v247 = vsel %vm241, %v245, %v246
      %v248 = vrot.slane %v181, 1
      %v249 = vrot.slane %v182, 1
      %v250 = vsel %vm241, %v248, %v249
      %v251 = vrot.slane %v183, 1
      %v252 = vrot.slane %v184, 1
      %v253 = vsel %vm241, %v251, %v252
      %v254 = vrot.slane %v185, 1
      %v255 = vrot.slane %v186, 1
      %v256 = vsel %vm241, %v254, %v255
      %v257 = vrot.slane %v187, 1
      %v258 = vrot.slane %v188, 1
      %v259 = vsel %vm241, %v257, %v258
      %v260 = vrot.slane %v189, 1
      %v261 = vrot.slane %v190, 1
      %v262 = vsel %vm241, %v260, %v261
      %v263 = vrot.slane %v191, 1
      %v264 = vrot.slane %v192, 1
      %v265 = vsel %vm241, %v263, %v264
      %v266 = vrot.slane %v193, 1
      %v267 = vrot.slane %v194, 1
      %v268 = vsel %vm241, %v266, %v267
      %v269 = vrot.slane %v195, 1
      %v270 = vrot.slane %v196, 1
      %v271 = vsel %vm241, %v269, %v270
      %v272 = vrot.slane %v197, 1
      %v273 = vrot.slane %v198, 1
      %v274 = vsel %vm241, %v272, %v273
      %v275 = vrot.slane %v199, 1
      %v276 = vrot.slane %v200, 1
      %v277 = vsel %vm241, %v275, %v276
      %v278 = vrot.slane %v201, 1
      %v279 = vrot.slane %v202, 1
      %v280 = vsel %vm241, %v278, %v279
      %v281 = vrot.slane %v203, 1
      %v282 = vrot.slane %v204, 1
      %v283 = vsel %vm241, %v281, %v282
      %v284 = vrot.slane %v205, 1
      %v285 = vrot.slane %v206, 1
      %v286 = vsel %vm241, %v284, %v285
      %v287 = vrot.slane %v207, 1
      %v288 = vrot.slane %v208, 1
      %v289 = vsel %vm241, %v287, %v288
      %290 = vrot.lane.b32.xlu0 %v244, 8
      %v291 = vpop.permute.xlu0 %290
      %292 = vrot.lane.b32.xlu0 %v243, 8
      %v293 = vpop.permute.xlu0 %292
      %294 = vrot.lane.b32.xlu0 %v247, 8
      %v295 = vpop.permute.xlu0 %294
      %296 = vrot.lane.b32.xlu0 %v246, 8
      %v297 = vpop.permute.xlu0 %296
      %298 = vrot.lane.b32.xlu0 %v250, 8
      %v299 = vpop.permute.xlu0 %298
      %300 = vrot.lane.b32.xlu0 %v249, 8
      %v301 = vpop.permute.xlu0 %300
      %302 = vrot.lane.b32.xlu0 %v253, 8
      %v303 = vpop.permute.xlu0 %302
      %304 = vrot.lane.b32.xlu0 %v252, 8
      %v305 = vpop.permute.xlu0 %304
      %306 = vrot.lane.b32.xlu0 %v256, 8
      %v307 = vpop.permute.xlu0 %306
      %308 = vrot.lane.b32.xlu0 %v255, 8
      %v309 = vpop.permute.xlu0 %308
      %310 = vrot.lane.b32.xlu0 %v259, 8
      %v311 = vpop.permute.xlu0 %310
      %312 = vrot.lane.b32.xlu0 %v258, 8
      %v313 = vpop.permute.xlu0 %312
      %314 = vrot.lane.b32.xlu0 %v262, 8
      %v315 = vpop.permute.xlu0 %314
      %316 = vrot.lane.b32.xlu0 %v261, 8
      %v317 = vpop.permute.xlu0 %316
      %318 = vrot.lane.b32.xlu0 %v265, 8
      %v319 = vpop.permute.xlu0 %318
      %320 = vrot.lane.b32.xlu0 %v264, 8
      %v321 = vpop.permute.xlu0 %320
      %322 = vrot.lane.b32.xlu0 %v268, 8
      %v323 = vpop.permute.xlu0 %322
      %324 = vrot.lane.b32.xlu0 %v267, 8
      %v325 = vpop.permute.xlu0 %324
      %326 = vrot.lane.b32.xlu0 %v271, 8
      %v327 = vpop.permute.xlu0 %326
      %328 = vrot.lane.b32.xlu0 %v270, 8
      %v329 = vpop.permute.xlu0 %328
      %330 = vrot.lane.b32.xlu0 %v274, 8
      %v331 = vpop.permute.xlu0 %330
      %332 = vrot.lane.b32.xlu0 %v273, 8
      %v333 = vpop.permute.xlu0 %332
      %334 = vrot.lane.b32.xlu0 %v277, 8
      %v335 = vpop.permute.xlu0 %334
      %336 = vrot.lane.b32.xlu0 %v276, 8
      %v337 = vpop.permute.xlu0 %336
      %338 = vrot.lane.b32.xlu0 %v280, 8
      %v339 = vpop.permute.xlu0 %338
      %340 = vrot.lane.b32.xlu0 %v279, 8
      %v341 = vpop.permute.xlu0 %340
      %342 = vrot.lane.b32.xlu0 %v283, 8
      %v343 = vpop.permute.xlu0 %342
      %344 = vrot.lane.b32.xlu0 %v282, 8
      %v345 = vpop.permute.xlu0 %344
      %346 = vrot.lane.b32.xlu0 %v286, 8
      %v347 = vpop.permute.xlu0 %346
      %348 = vrot.lane.b32.xlu0 %v285, 8
      %v349 = vpop.permute.xlu0 %348
      %350 = vrot.lane.b32.xlu0 %v289, 8
      %v351 = vpop.permute.xlu0 %350
      %352 = vrot.lane.b32.xlu0 %v288, 8
      %v353 = vpop.permute.xlu0 %352
      %vm386 = vcmask 1045504
      %v387 = vrot.slane %v177, 2
      %v388 = vrot.slane %v178, 2
      %v389 = vsel %vm386, %v387, %v388
      %v390 = vrot.slane %v179, 2
      %v391 = vrot.slane %v180, 2
      %v392 = vsel %vm386, %v390, %v391
      %v393 = vrot.slane %v181, 2
      %v394 = vrot.slane %v182, 2
      %v395 = vsel %vm386, %v393, %v394
      %v396 = vrot.slane %v183, 2
      %v397 = vrot.slane %v184, 2
      %v398 = vsel %vm386, %v396, %v397
      %v399 = vrot.slane %v185, 2
      %v400 = vrot.slane %v186, 2
      %v401 = vsel %vm386, %v399, %v400
      %v402 = vrot.slane %v187, 2
      %v403 = vrot.slane %v188, 2
      %v404 = vsel %vm386, %v402, %v403
      %v405 = vrot.slane %v189, 2
      %v406 = vrot.slane %v190, 2
      %v407 = vsel %vm386, %v405, %v406
      %v408 = vrot.slane %v191, 2
      %v409 = vrot.slane %v192, 2
      %v410 = vsel %vm386, %v408, %v409
      %v411 = vrot.slane %v193, 2
      %v412 = vrot.slane %v194, 2
      %v413 = vsel %vm386, %v411, %v412
      %v414 = vrot.slane %v195, 2
      %v415 = vrot.slane %v196, 2
      %v416 = vsel %vm386, %v414, %v415
      %v417 = vrot.slane %v197, 2
      %v418 = vrot.slane %v198, 2
      %v419 = vsel %vm386, %v417, %v418
      %v420 = vrot.slane %v199, 2
      %v421 = vrot.slane %v200, 2
      %v422 = vsel %vm386, %v420, %v421
      %v423 = vrot.slane %v201, 2
      %v424 = vrot.slane %v202, 2
      %v425 = vsel %vm386, %v423, %v424
      %v426 = vrot.slane %v203, 2
      %v427 = vrot.slane %v204, 2
      %v428 = vsel %vm386, %v426, %v427
      %v429 = vrot.slane %v205, 2
      %v430 = vrot.slane %v206, 2
      %v431 = vsel %vm386, %v429, %v430
      %v432 = vrot.slane %v207, 2
      %v433 = vrot.slane %v208, 2
      %v434 = vsel %vm386, %v432, %v433
      %435 = vrot.lane.b32.xlu0 %v389, 16
      %v436 = vpop.permute.xlu0 %435
      %437 = vrot.lane.b32.xlu0 %v388, 16
      %v438 = vpop.permute.xlu0 %437
      %439 = vrot.lane.b32.xlu0 %v392, 16
      %v440 = vpop.permute.xlu0 %439
      %441 = vrot.lane.b32.xlu0 %v391, 16
      %v442 = vpop.permute.xlu0 %441
      %443 = vrot.lane.b32.xlu0 %v395, 16
      %v444 = vpop.permute.xlu0 %443
      %445 = vrot.lane.b32.xlu0 %v394, 16
      %v446 = vpop.permute.xlu0 %445
      %447 = vrot.lane.b32.xlu0 %v398, 16
      %v448 = vpop.permute.xlu0 %447
      %449 = vrot.lane.b32.xlu0 %v397, 16
      %v450 = vpop.permute.xlu0 %449
      %451 = vrot.lane.b32.xlu0 %v401, 16
      %v452 = vpop.permute.xlu0 %451
      %453 = vrot.lane.b32.xlu0 %v400, 16
      %v454 = vpop.permute.xlu0 %453
      %455 = vrot.lane.b32.xlu0 %v404, 16
      %v456 = vpop.permute.xlu0 %455
      %457 = vrot.lane.b32.xlu0 %v403, 16
      %v458 = vpop.permute.xlu0 %457
      %459 = vrot.lane.b32.xlu0 %v407, 16
      %v460 = vpop.permute.xlu0 %459
      %461 = vrot.lane.b32.xlu0 %v406, 16
      %v462 = vpop.permute.xlu0 %461
      %463 = vrot.lane.b32.xlu0 %v410, 16
      %v464 = vpop.permute.xlu0 %463
      %465 = vrot.lane.b32.xlu0 %v409, 16
      %v466 = vpop.permute.xlu0 %465
      %467 = vrot.lane.b32.xlu0 %v413, 16
      %v468 = vpop.permute.xlu0 %467
      %469 = vrot.lane.b32.xlu0 %v412, 16
      %v470 = vpop.permute.xlu0 %469
      %471 = vrot.lane.b32.xlu0 %v416, 16
      %v472 = vpop.permute.xlu0 %471
      %473 = vrot.lane.b32.xlu0 %v415, 16
      %v474 = vpop.permute.xlu0 %473
      %475 = vrot.lane.b32.xlu0 %v419, 16
      %v476 = vpop.permute.xlu0 %475
      %477 = vrot.lane.b32.xlu0 %v418, 16
      %v478 = vpop.permute.xlu0 %477
      %479 = vrot.lane.b32.xlu0 %v422, 16
      %v480 = vpop.permute.xlu0 %479
      %481 = vrot.lane.b32.xlu0 %v421, 16
      %v482 = vpop.permute.xlu0 %481
      %483 = vrot.lane.b32.xlu0 %v425, 16
      %v484 = vpop.permute.xlu0 %483
      %485 = vrot.lane.b32.xlu0 %v424, 16
      %v486 = vpop.permute.xlu0 %485
      %487 = vrot.lane.b32.xlu0 %v428, 16
      %v488 = vpop.permute.xlu0 %487
      %489 = vrot.lane.b32.xlu0 %v427, 16
      %v490 = vpop.permute.xlu0 %489
      %491 = vrot.lane.b32.xlu0 %v431, 16
      %v492 = vpop.permute.xlu0 %491
      %493 = vrot.lane.b32.xlu0 %v430, 16
      %v494 = vpop.permute.xlu0 %493
      %495 = vrot.lane.b32.xlu0 %v434, 16
      %v496 = vpop.permute.xlu0 %495
      %497 = vrot.lane.b32.xlu0 %v433, 16
      %v498 = vpop.permute.xlu0 %497
      %vm531 = vcmask 1044480
      %v532 = vrot.slane %v177, 3
      %v533 = vrot.slane %v178, 3
      %v534 = vsel %vm531, %v532, %v533
      %v535 = vrot.slane %v179, 3
      %v536 = vrot.slane %v180, 3
      %v537 = vsel %vm531, %v535, %v536
      %v538 = vrot.slane %v181, 3
      %v539 = vrot.slane %v182, 3
      %v540 = vsel %vm531, %v538, %v539
      %v541 = vrot.slane %v183, 3
      %v542 = vrot.slane %v184, 3
      %v543 = vsel %vm531, %v541, %v542
      %v544 = vrot.slane %v185, 3
      %v545 = vrot.slane %v186, 3
      %v546 = vsel %vm531, %v544, %v545
      %v547 = vrot.slane %v187, 3
      %v548 = vrot.slane %v188, 3
      %v549 = vsel %vm531, %v547, %v548
      %v550 = vrot.slane %v189, 3
      %v551 = vrot.slane %v190, 3
      %v552 = vsel %vm531, %v550, %v551
      %v553 = vrot.slane %v191, 3
      %v554 = vrot.slane %v192, 3
      %v555 = vsel %vm531, %v553, %v554
      %v556 = vrot.slane %v193, 3
      %v557 = vrot.slane %v194, 3
      %v558 = vsel %vm531, %v556, %v557
      %v559 = vrot.slane %v195, 3
      %v560 = vrot.slane %v196, 3
      %v561 = vsel %vm531, %v559, %v560
      %v562 = vrot.slane %v197, 3
      %v563 = vrot.slane %v198, 3
      %v564 = vsel %vm531, %v562, %v563
      %v565 = vrot.slane %v199, 3
      %v566 = vrot.slane %v200, 3
      %v567 = vsel %vm531, %v565, %v566
      %v568 = vrot.slane %v201, 3
      %v569 = vrot.slane %v202, 3
      %v570 = vsel %vm531, %v568, %v569
      %v571 = vrot.slane %v203, 3
      %v572 = vrot.slane %v204, 3
      %v573 = vsel %vm531, %v571, %v572
      %v574 = vrot.slane %v205, 3
      %v575 = vrot.slane %v206, 3
      %v576 = vsel %vm531, %v574, %v575
      %v577 = vrot.slane %v207, 3
      %v578 = vrot.slane %v208, 3
      %v579 = vsel %vm531, %v577, %v578
      %580 = vrot.lane.b32.xlu0 %v534, 24
      %v581 = vpop.permute.xlu0 %580
      %582 = vrot.lane.b32.xlu0 %v533, 24
      %v583 = vpop.permute.xlu0 %582
      %584 = vrot.lane.b32.xlu0 %v537, 24
      %v585 = vpop.permute.xlu0 %584
      %586 = vrot.lane.b32.xlu0 %v536, 24
      %v587 = vpop.permute.xlu0 %586
      %588 = vrot.lane.b32.xlu0 %v540, 24
      %v589 = vpop.permute.xlu0 %588
      %590 = vrot.lane.b32.xlu0 %v539, 24
      %v591 = vpop.permute.xlu0 %590
      %592 = vrot.lane.b32.xlu0 %v543, 24
      %v593 = vpop.permute.xlu0 %592
      %594 = vrot.lane.b32.xlu0 %v542, 24
      %v595 = vpop.permute.xlu0 %594
      %596 = vrot.lane.b32.xlu0 %v546, 24
      %v597 = vpop.permute.xlu0 %596
      %598 = vrot.lane.b32.xlu0 %v545, 24
      %v599 = vpop.permute.xlu0 %598
      %600 = vrot.lane.b32.xlu0 %v549, 24
      %v601 = vpop.permute.xlu0 %600
      %602 = vrot.lane.b32.xlu0 %v548, 24
      %v603 = vpop.permute.xlu0 %602
      %604 = vrot.lane.b32.xlu0 %v552, 24
      %v605 = vpop.permute.xlu0 %604
      %606 = vrot.lane.b32.xlu0 %v551, 24
      %v607 = vpop.permute.xlu0 %606
      %608 = vrot.lane.b32.xlu0 %v555, 24
      %v609 = vpop.permute.xlu0 %608
      %610 = vrot.lane.b32.xlu0 %v554, 24
      %v611 = vpop.permute.xlu0 %610
      %612 = vrot.lane.b32.xlu0 %v558, 24
      %v613 = vpop.permute.xlu0 %612
      %614 = vrot.lane.b32.xlu0 %v557, 24
      %v615 = vpop.permute.xlu0 %614
      %616 = vrot.lane.b32.xlu0 %v561, 24
      %v617 = vpop.permute.xlu0 %616
      %618 = vrot.lane.b32.xlu0 %v560, 24
      %v619 = vpop.permute.xlu0 %618
      %620 = vrot.lane.b32.xlu0 %v564, 24
      %v621 = vpop.permute.xlu0 %620
      %622 = vrot.lane.b32.xlu0 %v563, 24
      %v623 = vpop.permute.xlu0 %622
      %624 = vrot.lane.b32.xlu0 %v567, 24
      %v625 = vpop.permute.xlu0 %624
      %626 = vrot.lane.b32.xlu0 %v566, 24
      %v627 = vpop.permute.xlu0 %626
      %628 = vrot.lane.b32.xlu0 %v570, 24
      %v629 = vpop.permute.xlu0 %628
      %630 = vrot.lane.b32.xlu0 %v569, 24
      %v631 = vpop.permute.xlu0 %630
      %632 = vrot.lane.b32.xlu0 %v573, 24
      %v633 = vpop.permute.xlu0 %632
      %634 = vrot.lane.b32.xlu0 %v572, 24
      %v635 = vpop.permute.xlu0 %634
      %636 = vrot.lane.b32.xlu0 %v576, 24
      %v637 = vpop.permute.xlu0 %636
      %638 = vrot.lane.b32.xlu0 %v575, 24
      %v639 = vpop.permute.xlu0 %638
      %640 = vrot.lane.b32.xlu0 %v579, 24
      %v641 = vpop.permute.xlu0 %640
      %642 = vrot.lane.b32.xlu0 %v578, 24
      %v643 = vpop.permute.xlu0 %642
      %vm676 = vcmask 1043456
      %v677 = vrot.slane %v177, 4
      %v678 = vrot.slane %v178, 4
      %v679 = vsel %vm676, %v677, %v678
      %v680 = vrot.slane %v179, 4
      %v681 = vrot.slane %v180, 4
      %v682 = vsel %vm676, %v680, %v681
      %v683 = vrot.slane %v181, 4
      %v684 = vrot.slane %v182, 4
      %v685 = vsel %vm676, %v683, %v684
      %v686 = vrot.slane %v183, 4
      %v687 = vrot.slane %v184, 4
      %v688 = vsel %vm676, %v686, %v687
      %v689 = vrot.slane %v185, 4
      %v690 = vrot.slane %v186, 4
      %v691 = vsel %vm676, %v689, %v690
      %v692 = vrot.slane %v187, 4
      %v693 = vrot.slane %v188, 4
      %v694 = vsel %vm676, %v692, %v693
      %v695 = vrot.slane %v189, 4
      %v696 = vrot.slane %v190, 4
      %v697 = vsel %vm676, %v695, %v696
      %v698 = vrot.slane %v191, 4
      %v699 = vrot.slane %v192, 4
      %v700 = vsel %vm676, %v698, %v699
      %v701 = vrot.slane %v193, 4
      %v702 = vrot.slane %v194, 4
      %v703 = vsel %vm676, %v701, %v702
      %v704 = vrot.slane %v195, 4
      %v705 = vrot.slane %v196, 4
      %v706 = vsel %vm676, %v704, %v705
      %v707 = vrot.slane %v197, 4
      %v708 = vrot.slane %v198, 4
      %v709 = vsel %vm676, %v707, %v708
      %v710 = vrot.slane %v199, 4
      %v711 = vrot.slane %v200, 4
      %v712 = vsel %vm676, %v710, %v711
      %v713 = vrot.slane %v201, 4
      %v714 = vrot.slane %v202, 4
      %v715 = vsel %vm676, %v713, %v714
      %v716 = vrot.slane %v203, 4
      %v717 = vrot.slane %v204, 4
      %v718 = vsel %vm676, %v716, %v717
      %v719 = vrot.slane %v205, 4
      %v720 = vrot.slane %v206, 4
      %v721 = vsel %vm676, %v719, %v720
      %v722 = vrot.slane %v207, 4
      %v723 = vrot.slane %v208, 4
      %v724 = vsel %vm676, %v722, %v723
      %725 = vrot.lane.b32.xlu0 %v679, 32
      %v726 = vpop.permute.xlu0 %725
      %727 = vrot.lane.b32.xlu0 %v678, 32
      %v728 = vpop.permute.xlu0 %727
      %729 = vrot.lane.b32.xlu0 %v682, 32
      %v730 = vpop.permute.xlu0 %729
      %731 = vrot.lane.b32.xlu0 %v681, 32
      %v732 = vpop.permute.xlu0 %731
      %733 = vrot.lane.b32.xlu0 %v685, 32
      %v734 = vpop.permute.xlu0 %733
      %735 = vrot.lane.b32.xlu0 %v684, 32
      %v736 = vpop.permute.xlu0 %735
      %737 = vrot.lane.b32.xlu0 %v688, 32
      %v738 = vpop.permute.xlu0 %737
      %739 = vrot.lane.b32.xlu0 %v687, 32
      %v740 = vpop.permute.xlu0 %739
      %741 = vrot.lane.b32.xlu0 %v691, 32
      %v742 = vpop.permute.xlu0 %741
      %743 = vrot.lane.b32.xlu0 %v690, 32
      %v744 = vpop.permute.xlu0 %743
      %745 = vrot.lane.b32.xlu0 %v694, 32
      %v746 = vpop.permute.xlu0 %745
      %747 = vrot.lane.b32.xlu0 %v693, 32
      %v748 = vpop.permute.xlu0 %747
      %749 = vrot.lane.b32.xlu0 %v697, 32
      %v750 = vpop.permute.xlu0 %749
      %751 = vrot.lane.b32.xlu0 %v696, 32
      %v752 = vpop.permute.xlu0 %751
      %753 = vrot.lane.b32.xlu0 %v700, 32
      %v754 = vpop.permute.xlu0 %753
      %755 = vrot.lane.b32.xlu0 %v699, 32
      %v756 = vpop.permute.xlu0 %755
      %757 = vrot.lane.b32.xlu0 %v703, 32
      %v758 = vpop.permute.xlu0 %757
      %759 = vrot.lane.b32.xlu0 %v702, 32
      %v760 = vpop.permute.xlu0 %759
      %761 = vrot.lane.b32.xlu0 %v706, 32
      %v762 = vpop.permute.xlu0 %761
      %763 = vrot.lane.b32.xlu0 %v705, 32
      %v764 = vpop.permute.xlu0 %763
      %765 = vrot.lane.b32.xlu0 %v709, 32
      %v766 = vpop.permute.xlu0 %765
      %767 = vrot.lane.b32.xlu0 %v708, 32
      %v768 = vpop.permute.xlu0 %767
      %769 = vrot.lane.b32.xlu0 %v712, 32
      %v770 = vpop.permute.xlu0 %769
      %771 = vrot.lane.b32.xlu0 %v711, 32
      %v772 = vpop.permute.xlu0 %771
      %773 = vrot.lane.b32.xlu0 %v715, 32
      %v774 = vpop.permute.xlu0 %773
      %775 = vrot.lane.b32.xlu0 %v714, 32
      %v776 = vpop.permute.xlu0 %775
      %777 = vrot.lane.b32.xlu0 %v718, 32
      %v778 = vpop.permute.xlu0 %777
      %779 = vrot.lane.b32.xlu0 %v717, 32
      %v780 = vpop.permute.xlu0 %779
      %781 = vrot.lane.b32.xlu0 %v721, 32
      %v782 = vpop.permute.xlu0 %781
      %783 = vrot.lane.b32.xlu0 %v720, 32
      %v784 = vpop.permute.xlu0 %783
      %785 = vrot.lane.b32.xlu0 %v724, 32
      %v786 = vpop.permute.xlu0 %785
      %787 = vrot.lane.b32.xlu0 %v723, 32
      %v788 = vpop.permute.xlu0 %787
      %vm821 = vcmask 64512
      %v822 = vsel %vm821, %v177, %v291
      %v823 = vsel %vm821, %v178, %v293
      %v824 = vsel %vm821, %v179, %v295
      %v825 = vsel %vm821, %v180, %v297
      %v826 = vsel %vm821, %v181, %v299
      %v827 = vsel %vm821, %v182, %v301
      %v828 = vsel %vm821, %v183, %v303
      %v829 = vsel %vm821, %v184, %v305
      %v830 = vsel %vm821, %v185, %v307
      %v831 = vsel %vm821, %v186, %v309
      %v832 = vsel %vm821, %v187, %v311
      %v833 = vsel %vm821, %v188, %v313
      %v834 = vsel %vm821, %v189, %v315
      %v835 = vsel %vm821, %v190, %v317
      %v836 = vsel %vm821, %v191, %v319
      %v837 = vsel %vm821, %v192, %v321
      %v838 = vsel %vm821, %v193, %v323
      %v839 = vsel %vm821, %v194, %v325
      %v840 = vsel %vm821, %v195, %v327
      %v841 = vsel %vm821, %v196, %v329
      %v842 = vsel %vm821, %v197, %v331
      %v843 = vsel %vm821, %v198, %v333
      %v844 = vsel %vm821, %v199, %v335
      %v845 = vsel %vm821, %v200, %v337
      %v846 = vsel %vm821, %v201, %v339
      %v847 = vsel %vm821, %v202, %v341
      %v848 = vsel %vm821, %v203, %v343
      %v849 = vsel %vm821, %v204, %v345
      %v850 = vsel %vm821, %v205, %v347
      %v851 = vsel %vm821, %v206, %v349
      %v852 = vsel %vm821, %v207, %v351
      %v853 = vsel %vm821, %v208, %v353
      %vm854 = vcmask 130048
      %v855 = vsel %vm854, %v822, %v436
      %v856 = vsel %vm854, %v823, %v438
      %v857 = vsel %vm854, %v824, %v440
      %v858 = vsel %vm854, %v825, %v442
      %v859 = vsel %vm854, %v826, %v444
      %v860 = vsel %vm854, %v827, %v446
      %v861 = vsel %vm854, %v828, %v448
      %v862 = vsel %vm854, %v829, %v450
      %v863 = vsel %vm854, %v830, %v452
      %v864 = vsel %vm854, %v831, %v454
      %v865 = vsel %vm854, %v832, %v456
      %v866 = vsel %vm854, %v833, %v458
      %v867 = vsel %vm854, %v834, %v460
      %v868 = vsel %vm854, %v835, %v462
      %v869 = vsel %vm854, %v836, %v464
      %v870 = vsel %vm854, %v837, %v466
      %v871 = vsel %vm854, %v838, %v468
      %v872 = vsel %vm854, %v839, %v470
      %v873 = vsel %vm854, %v840, %v472
      %v874 = vsel %vm854, %v841, %v474
      %v875 = vsel %vm854, %v842, %v476
      %v876 = vsel %vm854, %v843, %v478
      %v877 = vsel %vm854, %v844, %v480
      %v878 = vsel %vm854, %v845, %v482
      %v879 = vsel %vm854, %v846, %v484
      %v880 = vsel %vm854, %v847, %v486
      %v881 = vsel %vm854, %v848, %v488
      %v882 = vsel %vm854, %v849, %v490
      %v883 = vsel %vm854, %v850, %v492
      %v884 = vsel %vm854, %v851, %v494
      %v885 = vsel %vm854, %v852, %v496
      %v886 = vsel %vm854, %v853, %v498
      %vm887 = vcmask 195584
      %v888 = vsel %vm887, %v855, %v581
      %v889 = vsel %vm887, %v856, %v583
      %v890 = vsel %vm887, %v857, %v585
      %v891 = vsel %vm887, %v858, %v587
      %v892 = vsel %vm887, %v859, %v589
      %v893 = vsel %vm887, %v860, %v591
      %v894 = vsel %vm887, %v861, %v593
      %v895 = vsel %vm887, %v862, %v595
      %v896 = vsel %vm887, %v863, %v597
      %v897 = vsel %vm887, %v864, %v599
      %v898 = vsel %vm887, %v865, %v601
      %v899 = vsel %vm887, %v866, %v603
      %v900 = vsel %vm887, %v867, %v605
      %v901 = vsel %vm887, %v868, %v607
      %v902 = vsel %vm887, %v869, %v609
      %v903 = vsel %vm887, %v870, %v611
      %v904 = vsel %vm887, %v871, %v613
      %v905 = vsel %vm887, %v872, %v615
      %v906 = vsel %vm887, %v873, %v617
      %v907 = vsel %vm887, %v874, %v619
      %v908 = vsel %vm887, %v875, %v621
      %v909 = vsel %vm887, %v876, %v623
      %v910 = vsel %vm887, %v877, %v625
      %v911 = vsel %vm887, %v878, %v627
      %v912 = vsel %vm887, %v879, %v629
      %v913 = vsel %vm887, %v880, %v631
      %v914 = vsel %vm887, %v881, %v633
      %v915 = vsel %vm887, %v882, %v635
      %v916 = vsel %vm887, %v883, %v637
      %v917 = vsel %vm887, %v884, %v639
      %v918 = vsel %vm887, %v885, %v641
      %v919 = vsel %vm887, %v886, %v643
      %vm920 = vcmask 261120
      %v921 = vsel %vm920, %v888, %v726
      %v922 = vsel %vm920, %v889, %v728
      %v923 = vsel %vm920, %v890, %v730
      %v924 = vsel %vm920, %v891, %v732
      %v925 = vsel %vm920, %v892, %v734
      %v926 = vsel %vm920, %v893, %v736
      %v927 = vsel %vm920, %v894, %v738
      %v928 = vsel %vm920, %v895, %v740
      %v929 = vsel %vm920, %v896, %v742
      %v930 = vsel %vm920, %v897, %v744
      %v931 = vsel %vm920, %v898, %v746
      %v932 = vsel %vm920, %v899, %v748
      %v933 = vsel %vm920, %v900, %v750
      %v934 = vsel %vm920, %v901, %v752
      %v935 = vsel %vm920, %v902, %v754
      %v936 = vsel %vm920, %v903, %v756
      %v937 = vsel %vm920, %v904, %v758
      %v938 = vsel %vm920, %v905, %v760
      %v939 = vsel %vm920, %v906, %v762
      %v940 = vsel %vm920, %v907, %v764
      %v941 = vsel %vm920, %v908, %v766
      %v942 = vsel %vm920, %v909, %v768
      %v943 = vsel %vm920, %v910, %v770
      %v944 = vsel %vm920, %v911, %v772
      %v945 = vsel %vm920, %v912, %v774
      %v946 = vsel %vm920, %v913, %v776
      %v947 = vsel %vm920, %v914, %v778
      %v948 = vsel %vm920, %v915, %v780
      %v949 = vsel %vm920, %v916, %v782
      %v950 = vsel %vm920, %v917, %v784
      %v951 = vsel %vm920, %v918, %v786
      %v952 = vsel %vm920, %v919, %v788
      %v985 = vcombine.high %v921, %v921
      %v986 = vcombine.high %v923, %v923
      %v987 = vcombine.high %v925, %v925
      %v988 = vcombine.high %v927, %v927
      %v989 = vcombine.high %v929, %v929
      %v990 = vcombine.high %v931, %v931
      %v991 = vcombine.high %v933, %v933
      %v992 = vcombine.high %v935, %v935
      %v993 = vcombine.high %v937, %v937
      %v994 = vcombine.high %v939, %v939
      %v995 = vcombine.high %v941, %v941
      %v996 = vcombine.high %v943, %v943
      %v997 = vcombine.high %v945, %v945
      %v998 = vcombine.high %v947, %v947
      %v999 = vcombine.high %v949, %v949
      %v1000 = vcombine.high %v951, %v951
      %v1001 = vld [vmem:[%s1] sm:$0xff]
      %v1002 = vld [vmem:[%s1 + $0x8] sm:$0xff]
      %v1003 = vld [vmem:[%s1 + $0x10] sm:$0xff]
      %v1004 = vld [vmem:[%s1 + $0x18] sm:$0xff]
      %v1005 = vld [vmem:[%s1 + $0x20] sm:$0xff]
      %v1006 = vcombine.low %v921, %v985
      %v1007 = vcombine.low %v922, %v923
      %v1008 = vcombine.low %v986, %v924
      %v1009 = vcombine.low %v925, %v987
      %v1010 = vcombine.low %v926, %v927
      %v1011 = vcombine.low %v988, %v928
      %v1012 = vcombine.low %v929, %v989
      %v1013 = vcombine.low %v930, %v931
      %v1014 = vcombine.low %v990, %v932
      %v1015 = vcombine.low %v933, %v991
      %v1016 = vcombine.low %v934, %v935
      %v1017 = vcombine.low %v992, %v936
      %v1018 = vcombine.low %v937, %v993
      %v1019 = vcombine.low %v938, %v939
      %v1020 = vcombine.low %v994, %v940
      %v1021 = vcombine.low %v941, %v995
      %v1022 = vcombine.low %v942, %v943
      %v1023 = vcombine.low %v996, %v944
      %v1024 = vcombine.low %v945, %v997
      %v1025 = vcombine.low %v946, %v947
      %v1026 = vcombine.low %v998, %v948
      %v1027 = vcombine.low %v949, %v999
      %v1028 = vcombine.low %v950, %v951
      %v1029 = vcombine.low %v1000, %v952
      %vm1030 = vcmask 326656
      %v1031 = vsel %vm1030, %v1006, 0
      %v1033 = vsel %vm1030, %v1007, 0
      %v1035 = vsel %vm1030, %v1008, 0
      %v1037 = vsel %vm1030, %v1009, 0
      %v1039 = vsel %vm1030, %v1010, 0
      %v1041 = vsel %vm1030, %v1011, 0
      %v1043 = vsel %vm1030, %v1012, 0
      %v1045 = vsel %vm1030, %v1013, 0
      %v1047 = vsel %vm1030, %v1014, 0
      %v1049 = vsel %vm1030, %v1015, 0
      %v1051 = vsel %vm1030, %v1016, 0
      %v1053 = vsel %vm1030, %v1017, 0
      %v1055 = vsel %vm1030, %v1018, 0
      %v1057 = vsel %vm1030, %v1019, 0
      %v1059 = vsel %vm1030, %v1020, 0
      %v1061 = vsel %vm1030, %v1021, 0
      %v1063 = vsel %vm1030, %v1022, 0
      %v1065 = vsel %vm1030, %v1023, 0
      %v1067 = vsel %vm1030, %v1024, 0
      %v1069 = vsel %vm1030, %v1025, 0
      %v1071 = vsel %vm1030, %v1026, 0
      %v1073 = vsel %vm1030, %v1027, 0
      %v1075 = vsel %vm1030, %v1028, 0
      %v1077 = vsel %vm1030, %v1029, 0
      %1079 = vmatprep.subr.mxu0 0.0
      %1080 = vmatpush1.msra.mxu0 %v1001
      %1081 = vmatprep.subr.mxu0 0.0
      %1082 = vmatpush1.msra.mxu0 %v1002
      %1083 = vmatprep.subr.mxu0 0.0
      %1084 = vmatpush1.msra.mxu0 %v1003
      %1085 = vmatprep.subr.mxu0 0.0
      %1086 = vmatpush1.msra.mxu0 %v1004
      %1087 = vmatprep.subr.mxu0 0.0
      %1088 = vmatpush1.msra.mxu0 %v1005
      %1089 = vmatprep.subr.mxu0 0.0
      %1090 = vmatpush1.msra.mxu0 0.0
      %1091 = vmatprep.subr.mxu0 0.0
      %1092 = vmatpush1.msra.mxu0 0.0
      %1093 = vmatprep.subr.mxu0 0.0
      %1094 = vmatpush1.msra.mxu0 0.0
      %1095 = vmatprep.subr.mxu0 0.0
      %1096 = vmatpush1.msra.mxu0 0.0
      %1097 = vmatprep.subr.mxu0 0.0
      %1098 = vmatpush1.msra.mxu0 0.0
      %1099 = vmatprep.subr.mxu0 0.0
      %1100 = vmatpush1.msra.mxu0 0.0
      %1101 = vmatprep.subr.mxu0 0.0
      %1102 = vmatpush1.msra.mxu0 0.0
      %1103 = vmatprep.subr.mxu0 0.0
      %1104 = vmatpush1.msra.mxu0 0.0
      %1105 = vmatprep.subr.mxu0 0.0
      %1106 = vmatpush1.msra.mxu0 0.0
      %1107 = vmatprep.subr.mxu0 0.0
      %1108 = vmatpush1.msra.mxu0 0.0
      %1109 = vmatprep.subr.mxu0 0.0
      %1110 = vmatpush1.msra.mxu0 0.0
      %1111 = vmatprep.subr.mxu0 0.0
      %1112 = vmatpush1.msra.mxu0 0.0
      %1113 = vmatprep.subr.mxu0 0.0
      %1114 = vmatpush1.msra.mxu0 0.0
      %1115 = vmatprep.subr.mxu0 0.0
      %1116 = vmatpush1.msra.mxu0 0.0
      %1117 = vmatprep.subr.mxu0 0.0
      %1118 = vmatpush1.msra.mxu0 0.0
      %1119 = vmatprep.subr.mxu0 0.0
      %1120 = vmatpush1.msra.mxu0 0.0
      %1121 = vmatprep.subr.mxu0 0.0
      %1122 = vmatpush1.msra.mxu0 0.0
      %1123 = vmatprep.subr.mxu0 0.0
      %1124 = vmatpush1.msra.mxu0 0.0
      %1125 = vmatprep.subr.mxu0 0.0
      %1126 = vmatpush1.msra.mxu0 0.0
      %1127 = vmatprep.subr.mxu0 0.0
      %1128 = vmatpush1.msra.mxu0 0.0
      %1129 = vmatprep.subr.mxu0 0.0
      %1130 = vmatpush1.msra.mxu0 0.0
      %1131 = vmatprep.subr.mxu0 0.0
      %1132 = vmatpush1.msra.mxu0 0.0
      %1133 = vmatprep.subr.mxu0 0.0
      %1134 = vmatpush1.msra.mxu0 0.0
      %1135 = vmatprep.subr.mxu0 0.0
      %1136 = vmatpush1.msra.mxu0 0.0
      %1137 = vmatprep.subr.mxu0 0.0
      %1138 = vmatpush1.msra.mxu0 0.0
      %1139 = vmatprep.subr.mxu0 0.0
      %1140 = vmatpush1.msra.mxu0 0.0
      %1141 = vmatprep.subr.mxu0 0.0
      %1142 = vmatpush1.msra.mxu0 0.0
      %1143 = vmatprep.mubr.f32.mxu0 0.0
      %1144 = vmatmul.mubr.f32.gmra.mrb[0].mxu0 %v1031
      %v1145 = vpop.f32.mrb[0].mxu0
      %v1146 = vadd.f32 0.0, %v1145
      %v1147 = vpop.f32.mrb[0].mxu0
      %1148 = vmatprep.mubr.f32.mxu0 0.0
      %1149 = vmatmul.mubr.f32.gmra.mrb[0].mxu0 %v1033
      %v1150 = vpop.f32.mrb[0].mxu0
      %v1151 = vadd.f32 0.0, %v1150
      %v1152 = vpop.f32.mrb[0].mxu0
      %1153 = vmatprep.mubr.f32.mxu0 0.0
      %1154 = vmatmul.mubr.f32.gmra.mrb[0].mxu0 %v1035
      %v1155 = vpop.f32.mrb[0].mxu0
      %v1156 = vadd.f32 0.0, %v1155
      %v1157 = vpop.f32.mrb[0].mxu0
      %1158 = vmatprep.mubr.f32.mxu0 0.0
      %1159 = vmatmul.mubr.f32.gmra.mrb[0].mxu0 %v1037
      %v1160 = vpop.f32.mrb[0].mxu0
      %v1161 = vadd.f32 0.0, %v1160
      %v1162 = vpop.f32.mrb[0].mxu0
      %1163 = vmatprep.mubr.f32.mxu0 0.0
      %1164 = vmatmul.mubr.f32.gmra.mrb[0].mxu0 %v1039
      %v1165 = vpop.f32.mrb[0].mxu0
      %v1166 = vadd.f32 0.0, %v1165
      %v1167 = vpop.f32.mrb[0].mxu0
      %1168 = vmatprep.mubr.f32.mxu0 0.0
      %1169 = vmatmul.mubr.f32.gmra.mrb[0].mxu0 %v1041
      %v1170 = vpop.f32.mrb[0].mxu0
      %v1171 = vadd.f32 0.0, %v1170
      %v1172 = vpop.f32.mrb[0].mxu0
      %1173 = vmatprep.mubr.f32.mxu0 0.0
      %1174 = vmatmul.mubr.f32.gmra.mrb[0].mxu0 %v1043
      %v1175 = vpop.f32.mrb[0].mxu0
      %v1176 = vadd.f32 0.0, %v1175
      %v1177 = vpop.f32.mrb[0].mxu0
      %1178 = vmatprep.mubr.f32.mxu0 0.0
      %1179 = vmatmul.mubr.f32.gmra.mrb[0].mxu0 %v1045
      %v1180 = vpop.f32.mrb[0].mxu0
      %v1181 = vadd.f32 0.0, %v1180
      %v1182 = vpop.f32.mrb[0].mxu0
      %1183 = vmatprep.mubr.f32.mxu0 0.0
      %1184 = vmatmul.mubr.f32.gmra.mrb[0].mxu0 %v1047
      %v1185 = vpop.f32.mrb[0].mxu0
      %v1186 = vadd.f32 0.0, %v1185
      %v1187 = vpop.f32.mrb[0].mxu0
      %1188 = vmatprep.mubr.f32.mxu0 0.0
      %1189 = vmatmul.mubr.f32.gmra.mrb[0].mxu0 %v1049
      %v1190 = vpop.f32.mrb[0].mxu0
      %v1191 = vadd.f32 0.0, %v1190
      %v1192 = vpop.f32.mrb[0].mxu0
      %1193 = vmatprep.mubr.f32.mxu0 0.0
      %1194 = vmatmul.mubr.f32.gmra.mrb[0].mxu0 %v1051
      %v1195 = vpop.f32.mrb[0].mxu0
      %v1196 = vadd.f32 0.0, %v1195
      %v1197 = vpop.f32.mrb[0].mxu0
      %1198 = vmatprep.mubr.f32.mxu0 0.0
      %1199 = vmatmul.mubr.f32.gmra.mrb[0].mxu0 %v1053
      %v1200 = vpop.f32.mrb[0].mxu0
      %v1201 = vadd.f32 0.0, %v1200
      %v1202 = vpop.f32.mrb[0].mxu0
      %1203 = vmatprep.mubr.f32.mxu0 0.0
      %1204 = vmatmul.mubr.f32.gmra.mrb[0].mxu0 %v1055
      %v1205 = vpop.f32.mrb[0].mxu0
      %v1206 = vadd.f32 0.0, %v1205
      %v1207 = vpop.f32.mrb[0].mxu0
      %1208 = vmatprep.mubr.f32.mxu0 0.0
      %1209 = vmatmul.mubr.f32.gmra.mrb[0].mxu0 %v1057
      %v1210 = vpop.f32.mrb[0].mxu0
      %v1211 = vadd.f32 0.0, %v1210
      %v1212 = vpop.f32.mrb[0].mxu0
      %1213 = vmatprep.mubr.f32.mxu0 0.0
      %1214 = vmatmul.mubr.f32.gmra.mrb[0].mxu0 %v1059
      %v1215 = vpop.f32.mrb[0].mxu0
      %v1216 = vadd.f32 0.0, %v1215
      %v1217 = vpop.f32.mrb[0].mxu0
      %1218 = vmatprep.mubr.f32.mxu0 0.0
      %1219 = vmatmul.mubr.f32.gmra.mrb[0].mxu0 %v1061
      %v1220 = vpop.f32.mrb[0].mxu0
      %v1221 = vadd.f32 0.0, %v1220
      %v1222 = vpop.f32.mrb[0].mxu0
      %1223 = vmatprep.mubr.f32.mxu0 0.0
      %1224 = vmatmul.mubr.f32.gmra.mrb[0].mxu0 %v1063
      %v1225 = vpop.f32.mrb[0].mxu0
      %v1226 = vadd.f32 0.0, %v1225
      %v1227 = vpop.f32.mrb[0].mxu0
      %1228 = vmatprep.mubr.f32.mxu0 0.0
      %1229 = vmatmul.mubr.f32.gmra.mrb[0].mxu0 %v1065
      %v1230 = vpop.f32.mrb[0].mxu0
      %v1231 = vadd.f32 0.0, %v1230
      %v1232 = vpop.f32.mrb[0].mxu0
      %1233 = vmatprep.mubr.f32.mxu0 0.0
      %1234 = vmatmul.mubr.f32.gmra.mrb[0].mxu0 %v1067
      %v1235 = vpop.f32.mrb[0].mxu0
      %v1236 = vadd.f32 0.0, %v1235
      %v1237 = vpop.f32.mrb[0].mxu0
      %1238 = vmatprep.mubr.f32.mxu0 0.0
      %1239 = vmatmul.mubr.f32.gmra.mrb[0].mxu0 %v1069
      %v1240 = vpop.f32.mrb[0].mxu0
      %v1241 = vadd.f32 0.0, %v1240
      %v1242 = vpop.f32.mrb[0].mxu0
      %1243 = vmatprep.mubr.f32.mxu0 0.0
      %1244 = vmatmul.mubr.f32.gmra.mrb[0].mxu0 %v1071
      %v1245 = vpop.f32.mrb[0].mxu0
      %v1246 = vadd.f32 0.0, %v1245
      %v1247 = vpop.f32.mrb[0].mxu0
      %1248 = vmatprep.mubr.f32.mxu0 0.0
      %1249 = vmatmul.mubr.f32.gmra.mrb[0].mxu0 %v1073
      %v1250 = vpop.f32.mrb[0].mxu0
      %v1251 = vadd.f32 0.0, %v1250
      %v1252 = vpop.f32.mrb[0].mxu0
      %1253 = vmatprep.mubr.f32.mxu0 0.0
      %1254 = vmatmul.mubr.f32.gmra.mrb[0].mxu0 %v1075
      %v1255 = vpop.f32.mrb[0].mxu0
      %v1256 = vadd.f32 0.0, %v1255
      %v1257 = vpop.f32.mrb[0].mxu0
      %1258 = vmatprep.mubr.f32.mxu0 0.0
      %1259 = vmatmul.mubr.f32.gmra.mrb[0].mxu0 %v1077
      %v1260 = vpop.f32.mrb[0].mxu0
      %v1261 = vadd.f32 0.0, %v1260
      %v1262 = vpop.f32.mrb[0].mxu0
      %1263 = vdwg.mxu0
      %v1288 = vcombine.high %v1146, %v1146
      %v1289 = vcombine.high %v1151, %v1151
      %v1290 = vcombine.high %v1156, %v1156
      %v1291 = vcombine.high %v1161, %v1161
      %v1292 = vcombine.high %v1166, %v1166
      %v1293 = vcombine.high %v1171, %v1171
      %v1294 = vcombine.high %v1176, %v1176
      %v1295 = vcombine.high %v1181, %v1181
      %v1296 = vcombine.high %v1186, %v1186
      %v1297 = vcombine.high %v1191, %v1191
      %v1298 = vcombine.high %v1196, %v1196
      %v1299 = vcombine.high %v1201, %v1201
      %v1300 = vcombine.high %v1206, %v1206
      %v1301 = vcombine.high %v1211, %v1211
      %v1302 = vcombine.high %v1216, %v1216
      %v1303 = vcombine.high %v1221, %v1221
      %v1304 = vcombine.high %v1226, %v1226
      %v1305 = vcombine.high %v1231, %v1231
      %v1306 = vcombine.high %v1236, %v1236
      %v1307 = vcombine.high %v1241, %v1241
      %v1308 = vcombine.high %v1246, %v1246
      %v1309 = vcombine.high %v1251, %v1251
      %v1310 = vcombine.high %v1256, %v1256
      %v1311 = vcombine.high %v1261, %v1261
      %v1320 = vcombine.low %v1146, %v1288
      %v1321 = vcombine.low %v1289, %v1156
      %v1322 = vcombine.low %v1161, %v1291
      %v1323 = vcombine.low %v1292, %v1171
      %v1324 = vcombine.low %v1176, %v1294
      %v1325 = vcombine.low %v1295, %v1186
      %v1326 = vcombine.low %v1191, %v1297
      %v1327 = vcombine.low %v1298, %v1201
      %v1328 = vcombine.low %v1206, %v1300
      %v1329 = vcombine.low %v1301, %v1216
      %v1330 = vcombine.low %v1221, %v1303
      %v1331 = vcombine.low %v1304, %v1231
      %v1332 = vcombine.low %v1236, %v1306
      %v1333 = vcombine.low %v1307, %v1246
      %v1334 = vcombine.low %v1251, %v1309
      %v1335 = vcombine.low %v1310, %v1261
      %v1352 = vsel %vm676, %v1151, -inf
      %v1353 = vmax.f32 %v1320, %v1352
      %v1354 = vrot.slane %v1353, 4
      %v1355 = vmax.f32 %v1353, %v1354
      %v1356 = vrot.slane %v1355, 2
      %v1357 = vmax.f32 %v1355, %v1356
      %v1358 = vrot.slane %v1357, 1
      %v1359 = vmax.f32 %v1357, %v1358
      %v1360 = vsel %vm676, %v1290, -inf
      %v1361 = vmax.f32 %v1321, %v1360
      %v1362 = vrot.slane %v1361, 4
      %v1363 = vmax.f32 %v1361, %v1362
      %v1364 = vrot.slane %v1363, 2
      %v1365 = vmax.f32 %v1363, %v1364
      %v1366 = vrot.slane %v1365, 1
      %v1367 = vmax.f32 %v1365, %v1366
      %v1368 = vsel %vm676, %v1166, -inf
      %v1369 = vmax.f32 %v1322, %v1368
      %v1370 = vrot.slane %v1369, 4
      %v1371 = vmax.f32 %v1369, %v1370
      %v1372 = vrot.slane %v1371, 2
      %v1373 = vmax.f32 %v1371, %v1372
      %v1374 = vrot.slane %v1373, 1
      %v1375 = vmax.f32 %v1373, %v1374
      %v1376 = vsel %vm676, %v1293, -inf
      %v1377 = vmax.f32 %v1323, %v1376
      %v1378 = vrot.slane %v1377, 4
      %v1379 = vmax.f32 %v1377, %v1378
      %v1380 = vrot.slane %v1379, 2
      %v1381 = vmax.f32 %v1379, %v1380
      %v1382 = vrot.slane %v1381, 1
      %v1383 = vmax.f32 %v1381, %v1382
      %v1384 = vsel %vm676, %v1181, -inf
      %v1385 = vmax.f32 %v1324, %v1384
      %v1386 = vrot.slane %v1385, 4
      %v1387 = vmax.f32 %v1385, %v1386
      %v1388 = vrot.slane %v1387, 2
      %v1389 = vmax.f32 %v1387, %v1388
      %v1390 = vrot.slane %v1389, 1
      %v1391 = vmax.f32 %v1389, %v1390
      %v1392 = vsel %vm676, %v1296, -inf
      %v1393 = vmax.f32 %v1325, %v1392
      %v1394 = vrot.slane %v1393, 4
      %v1395 = vmax.f32 %v1393, %v1394
      %v1396 = vrot.slane %v1395, 2
      %v1397 = vmax.f32 %v1395, %v1396
      %v1398 = vrot.slane %v1397, 1
      %v1399 = vmax.f32 %v1397, %v1398
      %v1400 = vsel %vm676, %v1196, -inf
      %v1401 = vmax.f32 %v1326, %v1400
      %v1402 = vrot.slane %v1401, 4
      %v1403 = vmax.f32 %v1401, %v1402
      %v1404 = vrot.slane %v1403, 2
      %v1405 = vmax.f32 %v1403, %v1404
      %v1406 = vrot.slane %v1405, 1
      %v1407 = vmax.f32 %v1405, %v1406
      %v1408 = vsel %vm676, %v1299, -inf
      %v1409 = vmax.f32 %v1327, %v1408
      %v1410 = vrot.slane %v1409, 4
      %v1411 = vmax.f32 %v1409, %v1410
      %v1412 = vrot.slane %v1411, 2
      %v1413 = vmax.f32 %v1411, %v1412
      %v1414 = vrot.slane %v1413, 1
      %v1415 = vmax.f32 %v1413, %v1414
      %v1416 = vsel %vm676, %v1211, -inf
      %v1417 = vmax.f32 %v1328, %v1416
      %v1418 = vrot.slane %v1417, 4
      %v1419 = vmax.f32 %v1417, %v1418
      %v1420 = vrot.slane %v1419, 2
      %v1421 = vmax.f32 %v1419, %v1420
      %v1422 = vrot.slane %v1421, 1
      %v1423 = vmax.f32 %v1421, %v1422
      %v1424 = vsel %vm676, %v1302, -inf
      %v1425 = vmax.f32 %v1329, %v1424
      %v1426 = vrot.slane %v1425, 4
      %v1427 = vmax.f32 %v1425, %v1426
      %v1428 = vrot.slane %v1427, 2
      %v1429 = vmax.f32 %v1427, %v1428
      %v1430 = vrot.slane %v1429, 1
      %v1431 = vmax.f32 %v1429, %v1430
      %v1432 = vsel %vm676, %v1226, -inf
      %v1433 = vmax.f32 %v1330, %v1432
      %v1434 = vrot.slane %v1433, 4
      %v1435 = vmax.f32 %v1433, %v1434
      %v1436 = vrot.slane %v1435, 2
      %v1437 = vmax.f32 %v1435, %v1436
      %v1438 = vrot.slane %v1437, 1
      %v1439 = vmax.f32 %v1437, %v1438
      %v1440 = vsel %vm676, %v1305, -inf
      %v1441 = vmax.f32 %v1331, %v1440
      %v1442 = vrot.slane %v1441, 4
      %v1443 = vmax.f32 %v1441, %v1442
      %v1444 = vrot.slane %v1443, 2
      %v1445 = vmax.f32 %v1443, %v1444
      %v1446 = vrot.slane %v1445, 1
      %v1447 = vmax.f32 %v1445, %v1446
      %v1448 = vsel %vm676, %v1241, -inf
      %v1449 = vmax.f32 %v1332, %v1448
      %v1450 = vrot.slane %v1449, 4
      %v1451 = vmax.f32 %v1449, %v1450
      %v1452 = vrot.slane %v1451, 2
      %v1453 = vmax.f32 %v1451, %v1452
      %v1454 = vrot.slane %v1453, 1
      %v1455 = vmax.f32 %v1453, %v1454
      %v1456 = vsel %vm676, %v1308, -inf
      %v1457 = vmax.f32 %v1333, %v1456
      %v1458 = vrot.slane %v1457, 4
      %v1459 = vmax.f32 %v1457, %v1458
      %v1460 = vrot.slane %v1459, 2
      %v1461 = vmax.f32 %v1459, %v1460
      %v1462 = vrot.slane %v1461, 1
      %v1463 = vmax.f32 %v1461, %v1462
      %v1464 = vsel %vm676, %v1256, -inf
      %v1465 = vmax.f32 %v1334, %v1464
      %v1466 = vrot.slane %v1465, 4
      %v1467 = vmax.f32 %v1465, %v1466
      %v1468 = vrot.slane %v1467, 2
      %v1469 = vmax.f32 %v1467, %v1468
      %v1470 = vrot.slane %v1469, 1
      %v1471 = vmax.f32 %v1469, %v1470
      %v1472 = vsel %vm676, %v1311, -inf
      %v1473 = vmax.f32 %v1335, %v1472
      %v1474 = vrot.slane %v1473, 4
      %v1475 = vmax.f32 %v1473, %v1474
      %v1476 = vrot.slane %v1475, 2
      %v1477 = vmax.f32 %v1475, %v1476
      %v1478 = vrot.slane %v1477, 1
      %v1479 = vmax.f32 %v1477, %v1478
      %v1480 = vld [vmem:[%s2] sm:$0x1]
      %v1482 = vlaneseq
      %v1483 = vshrl.u32 %v1482, 7
      %v1484 = vsub.s32 0, %v1483
      %v1485 = vrot.slane %v1480, %v1484
      %v1487 = vadd.f32 %v1359, %v1485
      %v1488 = vadd.f32 %v1367, %v1485
      %v1489 = vadd.f32 %v1375, %v1485
      %v1490 = vadd.f32 %v1383, %v1485
      %v1491 = vadd.f32 %v1391, %v1485
      %v1492 = vadd.f32 %v1399, %v1485
      %v1493 = vadd.f32 %v1407, %v1485
      %v1494 = vadd.f32 %v1415, %v1485
      %v1495 = vadd.f32 %v1423, %v1485
      %v1496 = vadd.f32 %v1431, %v1485
      %v1497 = vadd.f32 %v1439, %v1485
      %v1498 = vadd.f32 %v1447, %v1485
      %v1499 = vadd.f32 %v1455, %v1485
      %v1500 = vadd.f32 %v1463, %v1485
      %v1501 = vadd.f32 %v1471, %v1485
      %v1502 = vadd.f32 %v1479, %v1485
      %v1503 = vmax.f32 %v1487, 0.0
      %v1504 = vmax.f32 %v1488, 0.0
      %v1505 = vmax.f32 %v1489, 0.0
      %v1506 = vmax.f32 %v1490, 0.0
      %v1507 = vmax.f32 %v1491, 0.0
      %v1508 = vmax.f32 %v1492, 0.0
      %v1509 = vmax.f32 %v1493, 0.0
      %v1510 = vmax.f32 %v1494, 0.0
      %v1511 = vmax.f32 %v1495, 0.0
      %v1512 = vmax.f32 %v1496, 0.0
      %v1513 = vmax.f32 %v1497, 0.0
      %v1514 = vmax.f32 %v1498, 0.0
      %v1515 = vmax.f32 %v1499, 0.0
      %v1516 = vmax.f32 %v1500, 0.0
      %v1517 = vmax.f32 %v1501, 0.0
      %v1518 = vmax.f32 %v1502, 0.0
      %v1535 = vrot.slane %v1504, 7
      %vm1536 = vcmask 1041409
      %v1537 = vsel %vm1536, %v1535, %v1503
      %v1538 = vrot.slane %v1505, 6
      %vm1539 = vcmask 1042434
      %v1540 = vsel %vm1539, %v1538, %v1537
      %v1541 = vrot.slane %v1506, 5
      %vm1542 = vcmask 1043459
      %v1543 = vsel %vm1542, %v1541, %v1540
      %v1544 = vrot.slane %v1507, 4
      %vm1545 = vcmask 1044484
      %v1546 = vsel %vm1545, %v1544, %v1543
      %v1547 = vrot.slane %v1508, 3
      %vm1548 = vcmask 1045509
      %v1549 = vsel %vm1548, %v1547, %v1546
      %v1550 = vrot.slane %v1509, 2
      %vm1551 = vcmask 1046534
      %v1552 = vsel %vm1551, %v1550, %v1549
      %v1553 = vrot.slane %v1510, 1
      %vm1554 = vcmask 1047559
      %v1555 = vsel %vm1554, %v1553, %v1552
      %v1556 = vrot.slane %v1512, 7
      %v1557 = vsel %vm1536, %v1556, %v1511
      %v1558 = vrot.slane %v1513, 6
      %v1559 = vsel %vm1539, %v1558, %v1557
      %v1560 = vrot.slane %v1514, 5
      %v1561 = vsel %vm1542, %v1560, %v1559
      %v1562 = vrot.slane %v1515, 4
      %v1563 = vsel %vm1545, %v1562, %v1561
      %v1564 = vrot.slane %v1516, 3
      %v1565 = vsel %vm1548, %v1564, %v1563
      %v1566 = vrot.slane %v1517, 2
      %v1567 = vsel %vm1551, %v1566, %v1565
      %v1568 = vrot.slane %v1518, 1
      %v1569 = vsel %vm1554, %v1568, %v1567
      %1572 = vst [vmem:[%s175] sm:$0xff] %v1555
      %1573 = vst [vmem:[%s175 + $0x8] sm:$0xff] %v1569
      %s1574 = smul.u32 2, %s14
      %p1575 = scmp.lt.s32.totalorder %s1574, 3
      %s1576 = scalar_select %p1575, %s1574, 3
      %s1577 = smul.addr %s1576, 8
      %s1578 = scalar_lea.vmem %s3, %s1577
      // Predicated region
      $region33: #{cnn_forward.1} parent=31 // pred_check
        %p1579 = pneg %p100
      $region34: #{cnn_forward.1} parent=31 // pred_check_branch
        %1581 = sbr.rel (%p1579) target = $region36
      $region35: #{cnn_forward.1} parent=31 // pred_region
        %s1582 = smul.u32 2, %s14
      $region36: #{cnn_forward.1} parent=31 // pred_fallthru
        _
    $region32: #{cnn_forward.1} parent=5 // pred_fallthru
      _
    %p1583 = scmp.le.s32.totalorder 2, %s9
    // Predicated region
    $region37: #{cnn_forward.1} parent=5 // pred_check
      %p1584 = pneg %p1583
    $region38: #{cnn_forward.1} parent=5 // pred_check_branch
      %1586 = sbr.rel (%p1584) target = $region40
    $region39: #{cnn_forward.1} parent=5 // pred_region
      %s1587 = ssub.s32 %s9, 2
      // Predicated region
      $region41: #{cnn_forward.1} parent=39 // pred_check
        %p1588 = pneg %p106
      $region42: #{cnn_forward.1} parent=39 // pred_check_branch
        %1590 = sbr.rel (%p1588) target = $region44
      $region43: #{cnn_forward.1} parent=39 // pred_region
        %s1591 = smul.u32 2, %s15
        %p1592 = scmp.lt.s32.totalorder %s1591, 3
        %s1593 = scalar_select %p1592, %s1591, 3
        %s1594 = smul.addr %s1593, 8
        %s1595 = scalar_lea.vmem %s3, %s1594
      $region44: #{cnn_forward.1} parent=39 // pred_fallthru
        _
    $region40: #{cnn_forward.1} parent=5 // pred_fallthru
      _
  $region6: #{cnn_forward.1} parent=0 // loop_footer
    %s13 = sadd.s32 1, %s9
  $region7: #{cnn_forward.1} parent=0 // loop_footer_branch
    %8 = sbr.rel target = $region3
  $region8: #{cnn_forward.1} parent=0 // loop_exit
    _

</llo_original>
